<compile_context>
chip_gen: v6e
topology: v6e:2x2x1
jax: 0.10.0
libtpu: 0.0.40
codegen_flags: <defaults>
</compile_context>

<pallas_src>
from functools import partial

import jax
import jax.numpy as jnp
from jax import lax
from jax.experimental import pallas as pl
from jax.experimental.pallas import tpu as pltpu


# ---------------------------------------------------------------------------
# Tiled linear kernel: o = x @ w + b   (qkv and proj projections)
# ---------------------------------------------------------------------------
def _linear_kernel(x_ref, w_ref, b_ref, o_ref):
    acc = jnp.dot(
        x_ref[...].astype(jnp.bfloat16),        # bf16 MXU operands,
        w_ref[...].astype(jnp.bfloat16),        # f32 accumulation
        preferred_element_type=jnp.float32,
    )
    o_ref[...] = (acc + b_ref[...]).astype(o_ref.dtype)


def _pick_block(dim, target, align):
    """Largest block <= target that exactly tiles `dim` and respects the TPU
    (8, 128) layout rule; falls back to the full dim (always legal)."""
    if dim <= target:
        return dim
    t = min(target, dim)
    t -= t % align
    while t >= align:
        if dim % t == 0:
            return t
        t -= align
    return dim


def linear(x2d, w, b2d, *, tm_target=512):
    M, K = x2d.shape
    N = w.shape[1]
    tm = _pick_block(M, tm_target, 8)
    return pl.pallas_call(
        _linear_kernel,
        out_shape=jax.ShapeDtypeStruct((M, N), x2d.dtype),
        grid=(M // tm,),
        in_specs=[
            pl.BlockSpec((tm, K), lambda i: (i, 0)),
            # weights / bias: constant index_map -> DMA'd once, VMEM-resident
            pl.BlockSpec((K, N), lambda i: (0, 0)),
            pl.BlockSpec((1, N), lambda i: (0, 0)),
        ],
        out_specs=pl.BlockSpec((tm, N), lambda i: (i, 0)),
        compiler_params=pltpu.CompilerParams(
            dimension_semantics=("parallel",)
        ),
    )(x2d, w, b2d)


# ---------------------------------------------------------------------------
# Lane-dense interleaved RoPE helpers (whole-slab, not per-head)
#   out[2i]   = t[2i]  * cos_i - t[2i+1] * sin_i
#   out[2i+1] = t[2i+1]* cos_i + t[2i]   * sin_i
# sin_e is nonzero only on even columns (-sin), sin_o only on odd (+sin), so
# the wrap-around lanes of the 1-lane shifts always hit a zero coefficient.
# ---------------------------------------------------------------------------
def _shift_left(x):   # y[..., i] = x[..., i + 1]
    return jnp.concatenate([x[:, 1:], x[:, :1]], axis=-1)


def _shift_right(x):  # y[..., i] = x[..., i - 1]
    return jnp.concatenate([x[:, -1:], x[:, :-1]], axis=-1)


def _rope(t, cos_t, sin_e, sin_o):
    return t * cos_t + _shift_left(t) * sin_e + _shift_right(t) * sin_o


# ---------------------------------------------------------------------------
# Fused RoPE + softmax attention kernel.
# Grid = (B, S//tq). qkv arrives packed, lane-dense, as a resident (1, S, 3C)
# block; output is written directly as the (1, tq, C) slab of (B, S, C).
# ---------------------------------------------------------------------------
def _rope_attn_kernel(qkv_ref, cos_ref, sin_e_ref, sin_o_ref, o_ref, *,
                      num_heads, tq, scale):
    S = qkv_ref.shape[1]
    C = qkv_ref.shape[2] // 3
    Dh = C // num_heads

    qt = pl.program_id(1)
    q0 = pl.multiple_of(qt * tq, tq)
    q_rows = pl.ds(q0, tq)

    # ---- RoPE on full-width slabs (f32 VPU math) --------------------------
    q = qkv_ref[0, q_rows, pl.ds(0, C)] * scale               # (tq, C)
    k = qkv_ref[0, :, pl.ds(C, C)]                            # (S,  C)

    q_rot = _rope(q, cos_ref[q_rows, :], sin_e_ref[q_rows, :], sin_o_ref[q_rows, :])
    k_rot = _rope(k, cos_ref[...], sin_e_ref[...], sin_o_ref[...])

    q_bf = q_rot.astype(jnp.bfloat16)                         # MXU operands
    k_bf = k_rot.astype(jnp.bfloat16)

    ones_col = jnp.ones((S, 1), dtype=jnp.bfloat16)

    for h in range(num_heads):                                # static head loop
        # scores[i, j] = sum_d q_rot[i, d] * k_rot[j, d]   (bf16 in, f32 acc)
        scores = lax.dot_general(
            q_bf[:, h * Dh:(h + 1) * Dh],
            k_bf[:, h * Dh:(h + 1) * Dh],
            dimension_numbers=(((1,), (1,)), ((), ())),
            preferred_element_type=jnp.float32,
        )                                                     # (tq, S)

        # numerically-stable softmax (f32 VPU/EUP); row-sum deferred to MXU
        m = jnp.max(scores, axis=-1, keepdims=True)
        p = jnp.exp(scores - m).astype(jnp.bfloat16)

        v_aug = jnp.concatenate(
            [qkv_ref[0, :, pl.ds(2 * C + h * Dh, Dh)].astype(jnp.bfloat16),
             ones_col],
            axis=-1,
        )                                                     # (S, Dh + 1)
        pv = jnp.dot(p, v_aug, preferred_element_type=jnp.float32)  # (tq, Dh+1)

        inv_l = pl.reciprocal(pv[:, Dh:Dh + 1], approx=True)  # EUP reciprocal
        o_ref[0, :, pl.ds(h * Dh, Dh)] = (pv[:, :Dh] * inv_l).astype(o_ref.dtype)


def rope_attention_core(qkv, cos_t, sin_e, sin_o, num_heads, *, tq_target=256):
    B, S, C3 = qkv.shape
    C = C3 // 3
    Dh = C // num_heads
    tq = _pick_block(S, tq_target, 8)
    scale = 1.0 / (Dh ** 0.5)                  # SDPA default scale
    return pl.pallas_call(
        partial(_rope_attn_kernel, num_heads=num_heads, tq=tq, scale=scale),
        out_shape=jax.ShapeDtypeStruct((B, S, C), qkv.dtype),
        grid=(B, S // tq),
        in_specs=[
            # constant across qt -> resident, no re-DMA per query tile
            pl.BlockSpec((1, S, C3), lambda b, qt: (b, 0, 0)),
            pl.BlockSpec((S, C), lambda b, qt: (0, 0)),
            pl.BlockSpec((S, C), lambda b, qt: (0, 0)),
            pl.BlockSpec((S, C), lambda b, qt: (0, 0)),
        ],
        out_specs=pl.BlockSpec((1, tq, C), lambda b, qt: (b, qt, 0)),
        compiler_params=pltpu.CompilerParams(
            dimension_semantics=("parallel", "parallel"),
            vmem_limit_bytes=64 << 20,
        ),
    )(qkv, cos_t, sin_e, sin_o)


# ---------------------------------------------------------------------------
# Host-side RoPE tables (RoPE.prepare_freqs((1, S)) frequencies), tiled to
# full (S, C) width so the in-kernel rotation is lane-dense.
# ---------------------------------------------------------------------------
def make_rope_tables(S, C, num_heads, theta=10000.0):
    Dh = C // num_heads
    inv_freq = 1.0 / (theta ** (jnp.arange(0, Dh, 2, dtype=jnp.float32) / Dh))
    pos = jnp.arange(S, dtype=jnp.float32)
    fr = pos[:, None] * inv_freq[None, :]                     # (S, Dh // 2)
    cos_h, sin_h = jnp.cos(fr), jnp.sin(fr)
    z = jnp.zeros_like(sin_h)
    cos_head = jnp.repeat(cos_h, 2, axis=-1)                               # (S, Dh)
    sin_e_head = jnp.stack([-sin_h, z], axis=-1).reshape(S, Dh)            # -sin on even cols
    sin_o_head = jnp.stack([z, sin_h], axis=-1).reshape(S, Dh)             # +sin on odd cols
    tile = lambda t: jnp.tile(t, (1, num_heads))                           # (S, C)
    return tile(cos_head), tile(sin_e_head), tile(sin_o_head)


# ---------------------------------------------------------------------------
# Full attention forward (RoPE applied to q/k, SDPA, output projection)
# ---------------------------------------------------------------------------
def attention_forward(x, params, num_heads):
    B, S, C = x.shape

    qkv = linear(x.reshape(B * S, C), params["w_qkv"],
                 params["b_qkv"].reshape(1, -1))
    qkv = qkv.reshape(B, S, 3 * C)

    cos_t, sin_e, sin_o = make_rope_tables(S, C, num_heads)

    attn = rope_attention_core(qkv, cos_t, sin_e, sin_o, num_heads)  # (B, S, C)

    out = linear(attn.reshape(B * S, C), params["w_proj"],
                 params["b_proj"].reshape(1, -1))
    return out.reshape(B, S, C)


# ---------------------------------------------------------------------------
# Pure-JAX f32 reference faithful to the PyTorch code
# ---------------------------------------------------------------------------
def reference(x, params, num_heads):
    B, S, C = x.shape
    Dh = C // num_heads
    qkv = x @ params["w_qkv"] + params["b_qkv"]
    qkv = qkv.reshape(B, S, 3, num_heads, Dh).transpose(2, 0, 3, 1, 4)
    q, k, v = qkv[0], qkv[1], qkv[2]

    inv_freq = 1.0 / (10000.0 ** (jnp.arange(0, Dh, 2, dtype=jnp.float32) / Dh))
    pos = jnp.arange(S, dtype=jnp.float32)
    fr = jnp.repeat(pos[:, None] * inv_freq[None, :], 2, axis=-1)  # (S, Dh)

    def rotate_half(t):
        t2d = t.reshape(t.shape[:-1] + (t.shape[-1] // 2, 2))
        t1, t2 = t2d[..., 0], t2d[..., 1]
        return jnp.stack([-t2, t1], axis=-1).reshape(t.shape)

    def apply_rope(t):
        return t * jnp.cos(fr) + rotate_half(t) * jnp.sin(fr)

    q = apply_rope(q)
    k = apply_rope(k)
    scale = 1.0 / (Dh ** 0.5)
    scores = jnp.einsum("bhqd,bhkd->bhqk", q, k) * scale
    p = jax.nn.softmax(scores, axis=-1)
    o = jnp.einsum("bhqk,bhkd->bhqd", p, v)
    o = o.transpose(0, 2, 1, 3).reshape(B, S, C)
    return o @ params["w_proj"] + params["b_proj"]


if __name__ == "__main__":
    B, S, dim, num_heads = 2, 8, 32, 4
    key = jax.random.PRNGKey(0)
    k1, k2, k3, k4 = jax.random.split(key, 4)

    x = jax.random.normal(k1, (B, S, dim), dtype=jnp.float32)
    params = {
        "w_qkv": 0.05 * jax.random.normal(k2, (dim, 3 * dim), dtype=jnp.float32),
        "b_qkv": jnp.zeros((3 * dim,), dtype=jnp.float32),  # qkv_bias=False
        "w_proj": 0.05 * jax.random.normal(k3, (dim, dim), dtype=jnp.float32),
        "b_proj": 0.01 * jax.random.normal(k4, (dim,), dtype=jnp.float32),
    }

    out = attention_forward(x, params, num_heads)
    jax.block_until_ready(out)

    ref = reference(x, params, num_heads)
    assert out.shape == (B, S, dim)
    # tolerance relaxed vs the f32 reference because the kernel feeds the MXU
    # bf16 operands (f32 accumulation) and uses pl.reciprocal(approx=True)
    err = float(jnp.max(jnp.abs(out - ref)))
    assert jnp.allclose(out, ref, atol=2e-2, rtol=2e-2), err
    print("KERNEL_OK")
</pallas_src>

<mosaic_0001>
module attributes {stable_mosaic.version = 11 : i64} {
  func.func @_linear_kernel(%arg0: i32, %arg1: memref<16x32xf32, #tpu.memory_space<vmem>>, %arg2: memref<32x96xf32, #tpu.memory_space<vmem>>, %arg3: memref<1x96xf32, #tpu.memory_space<vmem>>, %arg4: memref<16x96xf32, #tpu.memory_space<vmem>>) attributes {dimension_semantics = [#tpu.dimension_semantics<parallel>], iteration_bounds = array<i64: 1>, scalar_prefetch = 0 : i64, scratch_operands = 0 : i64, tpu.core_type = #tpu.core_type<tc>, window_params = [{transform_indices = @transform_0, window_bounds = array<i64: 16, 32>}, {pipeline_mode = #tpu.pipeline_mode<synchronous>, transform_indices = @transform_1, window_bounds = array<i64: 32, 96>}, {pipeline_mode = #tpu.pipeline_mode<synchronous>, transform_indices = @transform_2, window_bounds = array<i64: 1, 96>}, {transform_indices = @transform_3, window_bounds = array<i64: 16, 96>}]} {
    %c0 = arith.constant 0 : index
    %c0_0 = arith.constant 0 : index
    %0 = vector.load %arg1[%c0, %c0_0] : memref<16x32xf32, #tpu.memory_space<vmem>>, vector<16x32xf32>
    %1 = arith.truncf %0 : vector<16x32xf32> to vector<16x32xbf16>
    %c0_1 = arith.constant 0 : index
    %c0_2 = arith.constant 0 : index
    %2 = vector.load %arg2[%c0_1, %c0_2] : memref<32x96xf32, #tpu.memory_space<vmem>>, vector<32x96xf32>
    %3 = arith.truncf %2 : vector<32x96xf32> to vector<32x96xbf16>
    %cst = arith.constant dense<0.000000e+00> : vector<16x96xf32>
    %4 = tpu.matmul %1, %3, %cst {dimension_numbers = #tpu.dot_dimension_numbers<[1], [0], [0], [1], [0, 0, 1, 1], [], []>} : vector<16x32xbf16>, vector<32x96xbf16>, vector<16x96xf32> -> vector<16x96xf32>
    %c0_3 = arith.constant 0 : index
    %c0_4 = arith.constant 0 : index
    %5 = vector.load %arg3[%c0_3, %c0_4] : memref<1x96xf32, #tpu.memory_space<vmem>>, vector<1x96xf32>
    %6 = vector.broadcast %5 : vector<1x96xf32> to vector<16x96xf32>
    %7 = arith.addf %4, %6 : vector<16x96xf32>
    %c0_5 = arith.constant 0 : index
    %c0_6 = arith.constant 0 : index
    %8 = vector.load %arg4[%c0_5, %c0_6] : memref<16x96xf32, #tpu.memory_space<vmem>>, vector<16x96xf32>
    tpu.vector_store %arg4[%c0_5, %c0_6], %7 {strides = array<i32>} : memref<16x96xf32, #tpu.memory_space<vmem>>, vector<16x96xf32>,
    return
  }
  func.func @transform_0(%arg0: i32) -> (i32, i32) {
    %c0_i32 = arith.constant 0 : i32
    %c0_i32_0 = arith.constant 0 : i32
    return %arg0, %c0_i32 : i32, i32
  }
  func.func @transform_1(%arg0: i32) -> (i32, i32) {
    %c0_i32 = arith.constant 0 : i32
    %c0_i32_0 = arith.constant 0 : i32
    %c0_i32_1 = arith.constant 0 : i32
    return %c0_i32, %c0_i32_0 : i32, i32
  }
  func.func @transform_2(%arg0: i32) -> (i32, i32) {
    %c0_i32 = arith.constant 0 : i32
    %c0_i32_0 = arith.constant 0 : i32
    %c0_i32_1 = arith.constant 0 : i32
    return %c0_i32, %c0_i32_0 : i32, i32
  }
  func.func @transform_3(%arg0: i32) -> (i32, i32) {
    %c0_i32 = arith.constant 0 : i32
    %c0_i32_0 = arith.constant 0 : i32
    return %arg0, %c0_i32 : i32, i32
  }
}

</mosaic_0001>

<llo_original>
// kernel: tpu_custom_call.1
$region0: #{tpu_custom_call.1}
  #allocation0 [shape = 'u32[]', space=smem, size = 0x4, offset = 0x4, fixed_abs, tag = 'smem constant byte address 0x4 - core index']
  #allocation1 [shape = 'u32[144,128]{1,0:T(1,128)}', space=vmem, size = 0x12000, scoped, tag = 'internal scratch']
  %s0 = inlined_call_operand.hbm [shape: f32[16,32], index: 0, kind: input, shape index: {}]
  %s1 = inlined_call_operand.hbm [shape: f32[32,96], index: 1, kind: input, shape index: {}]
  %s2 = inlined_call_operand.vmem [shape: f32[1,96], index: 2, kind: input, shape index: {}]
  %s3 = inlined_call_operand.hbm [shape: f32[16,96], index: 3, kind: output, shape index: {}]
  %s4 = sld [smem:[#allocation0]]
  $region30: #{tpu_custom_call.1} parent=0
    _
  %s6 = ssub.s32 1, %s4
  %s7 = scalar_select 0, %s6, %s4
  $region1: #{tpu_custom_call.1} parent=0
    #allocation2 [shape = 'u8[8192]{0}', space=vmem, size = 0x2000, scoped, tag = 'input window, operand 0, single buffered']
    #allocation3 [shape = 's32[1]{0}', space=sflag, size = 0x4, scoped, tag = 'scoped memory for tpu_custom_call.1']
    #allocation4 [shape = 's32[1]{0}', space=sflag, size = 0x4, scoped, tag = 'scoped memory for tpu_custom_call.1']
    #allocation5 [shape = 'u8[16384]{0}', space=vmem, size = 0x4000, scoped, tag = 'input window, operand 1, single buffered']
    #allocation6 [shape = 's32[1]{0}', space=sflag, size = 0x4, scoped, tag = 'scoped memory for tpu_custom_call.1']
    #allocation7 [shape = 'u8[8192]{0}', space=vmem, size = 0x2000, scoped, tag = 'output window, operand 0, single buffered']
    %8 = vsyncpa [#allocation3], 0
    %9 = vsyncpa [#allocation6], 0
    %10 = vsyncpa [#allocation4], 0
    // Predicated region
    $region2: #{tpu_custom_call.1} parent=1 // pred_check
      _
    $region3: #{tpu_custom_call.1} parent=1 // pred_check_branch
      %12 = sbr.rel (0) target = $region5
    $region4: #{tpu_custom_call.1} parent=1 // pred_region
      %s14 = ssub.s32 256, 256
      %15 = vsyncadd [#allocation3], %s14
      %s16 = sshll.u32 [#allocation2], 4
      %s17 = int_to_ptr.vmem [resolvable:$true] %s16
      %22 = dma.hbm_to_vmem [thread:$0]  %s0, 256, %s17, [#allocation3], 128, 128, 8
    $region5: #{tpu_custom_call.1} parent=1 // pred_fallthru
      _
    // Predicated region
    $region6: #{tpu_custom_call.1} parent=1 // pred_check
      _
    $region7: #{tpu_custom_call.1} parent=1 // pred_check_branch
      %24 = sbr.rel (0) target = $region9
    $region8: #{tpu_custom_call.1} parent=1 // pred_region
      %s26 = ssub.s32 512, 512
      %27 = vsyncadd [#allocation6], %s26
      %s28 = sshll.u32 [#allocation5], 4
      %s29 = int_to_ptr.vmem [resolvable:$true] %s28
      %34 = dma.hbm_to_vmem [thread:$0]  %s1, 512, %s29, [#allocation6], 128, 128, 8
    $region9: #{tpu_custom_call.1} parent=1 // pred_fallthru
      _
    // Predicated region
    $region10: #{tpu_custom_call.1} parent=1 // pred_check
      _
    $region11: #{tpu_custom_call.1} parent=1 // pred_check_branch
      %36 = sbr.rel (0) target = $region13
    $region12: #{tpu_custom_call.1} parent=1 // pred_region
      _
    $region13: #{tpu_custom_call.1} parent=1 // pred_fallthru
      _
    // Predicated region
    $region14: #{tpu_custom_call.1} parent=1 // pred_check
      _
    $region15: #{tpu_custom_call.1} parent=1 // pred_check_branch
      %38 = sbr.rel (0) target = $region17
    $region16: #{tpu_custom_call.1} parent=1 // pred_region
      %39 = dma.done [#allocation3], 256
    $region17: #{tpu_custom_call.1} parent=1 // pred_fallthru
      _
    // Predicated region
    $region18: #{tpu_custom_call.1} parent=1 // pred_check
      _
    $region19: #{tpu_custom_call.1} parent=1 // pred_check_branch
      %41 = sbr.rel (0) target = $region21
    $region20: #{tpu_custom_call.1} parent=1 // pred_region
      %42 = dma.done [#allocation6], 512
    $region21: #{tpu_custom_call.1} parent=1 // pred_fallthru
      _
    %v44 = vld [vmem:[#allocation2] sm:$0xff]
    %v45 = vld [vmem:[#allocation2 + $0x8] sm:$0xff]
    %v46 = vpack.c.bf16 %v45, %v44
    %v47 = vld [vmem:[#allocation5] sm:$0xff]
    %v48 = vld [vmem:[#allocation5 + $0x8] sm:$0xff]
    %v49 = vld [vmem:[#allocation5 + $0x10] sm:$0xff]
    %v50 = vld [vmem:[#allocation5 + $0x18] sm:$0xff]
    %v51 = vpack.c.bf16 %v48, %v47
    %v52 = vpack.c.bf16 %v50, %v49
    %v53 = vld [vmem:[%s2] sm:$0x1]
    %v55 = vlaneseq
    %v56 = vshrl.u32 %v55, 7
    %v57 = vsub.s32 0, %v56
    %v58 = vrot.slane %v53, %v57
    %vm60 = vcmask 261120
    %v62 = vsel %vm60, %v46, 0
    %64 = vmatprep.subr.bf16.mxu0 0
    %65 = vmatpush1.bf16.msra.mxu0 0
    %66 = vmatprep.subr.bf16.mxu0 0
    %67 = vmatpush1.bf16.msra.mxu0 0
    %68 = vmatprep.subr.bf16.mxu0 0
    %69 = vmatpush1.bf16.msra.mxu0 0
    %70 = vmatprep.subr.bf16.mxu0 0
    %71 = vmatpush1.bf16.msra.mxu0 0
    %72 = vmatprep.subr.bf16.mxu0 0
    %73 = vmatpush1.bf16.msra.mxu0 0
    %74 = vmatprep.subr.bf16.mxu0 0
    %75 = vmatpush1.bf16.msra.mxu0 0
    %76 = vmatprep.subr.bf16.mxu0 0
    %77 = vmatpush1.bf16.msra.mxu0 %v52
    %78 = vmatprep.subr.bf16.mxu0 0
    %79 = vmatpush1.bf16.msra.mxu0 %v51
    %80 = vmatprep.subr.bf16.mxu0 0
    %81 = vmatpush2.bf16.msra.mxu0 0
    %82 = vmatprep.subr.bf16.mxu0 0
    %83 = vmatpush2.bf16.msra.mxu0 0
    %84 = vmatprep.subr.bf16.mxu0 0
    %85 = vmatpush2.bf16.msra.mxu0 0
    %86 = vmatprep.subr.bf16.mxu0 0
    %87 = vmatpush2.bf16.msra.mxu0 0
    %88 = vmatprep.subr.bf16.mxu0 0
    %89 = vmatpush2.bf16.msra.mxu0 0
    %90 = vmatprep.subr.bf16.mxu0 0
    %91 = vmatpush2.bf16.msra.mxu0 0
    %92 = vmatprep.subr.bf16.mxu0 0
    %93 = vmatpush2.bf16.msra.mxu0 0
    %94 = vmatprep.subr.bf16.mxu0 0
    %95 = vmatpush2.bf16.msra.mxu0 0
    %96 = vmatprep.mubr.bf16.mxu0 0
    %97 = vmatmul.mubr.bf16.gmra.mxu0 %v62
    %v98 = vpop.f32.mrf.mxu0
    %v99 = vadd.f32 %v58, %v98
    %v100 = vpop.f32.mrf.mxu0
    %v101 = vpop.f32.mrf.mxu0
    %v102 = vadd.f32 %v58, %v101
    %v103 = vpop.f32.mrf.mxu0
    %104 = vdwg.mxu0
    %vm105 = vcmask 785408
    %106 = vst.msk [vmem:[#allocation7] sm:$0xff] %vm105, %v99
    %107 = vst.msk [vmem:[#allocation7 + $0x8] sm:$0xff] %vm105, %v102
    // Predicated region
    $region22: #{tpu_custom_call.1} parent=1 // pred_check
      _
    $region23: #{tpu_custom_call.1} parent=1 // pred_check_branch
      %109 = sbr.rel (0) target = $region25
    $region24: #{tpu_custom_call.1} parent=1 // pred_region
      %s111 = ssub.s32 256, 256
      %112 = vsyncadd [#allocation4], %s111
      %s113 = sshll.u32 [#allocation7], 4
      %s114 = int_to_ptr.vmem [resolvable:$true] %s113
      %119 = dma.vmem_to_hbm [thread:$0]  %s114, 256, %s3, [#allocation4], 128, 128, 8
    $region25: #{tpu_custom_call.1} parent=1 // pred_fallthru
      _
    // Predicated region
    $region26: #{tpu_custom_call.1} parent=1 // pred_check
      _
    $region27: #{tpu_custom_call.1} parent=1 // pred_check_branch
      %121 = sbr.rel (0) target = $region29
    $region28: #{tpu_custom_call.1} parent=1 // pred_region
      %122 = dma.done [#allocation4], 256
    $region29: #{tpu_custom_call.1} parent=1 // pred_fallthru
      _
    %123 = vsyncpa [#allocation3], 1
    %124 = vsyncpa [#allocation6], 1
    %125 = vsyncpa [#allocation4], 1

</llo_original>
